<compile_context>
chip_gen: v5e
topology: v5e:2x2
jax: 0.10.0
libtpu: 0.0.40
codegen_flags: <defaults>
</compile_context>

<pallas_src>
import jax
import jax.numpy as jnp
from jax.experimental import pallas as pl
from jax.experimental.pallas import tpu as pltpu


HID1, HID2 = 256, 128
HID3_PAD = 128        # logical 64, padded to a full 128-lane tile
OUT_PAD = 128         # logical action_dim, padded to a full 128-lane tile
WPACK_ROWS = HID1 + 2 * HID3_PAD   # 512: packed fc2 / fc3 / fc4 weights


def _round_up(x, m):
    return (x + m - 1) // m * m


def _num_tensorcores():
    """2 on v7x (dual-TensorCore chips), 1 on v5e/v6e. Perf-only heuristic."""
    try:
        kind = jax.devices()[0].device_kind.lower()
        if "v7" in kind:
            return 2
    except Exception:
        pass
    return 1


def _actor_kernel(lim_ref, s_ref, w1_ref, wpk_ref, b_ref, out_ref):
    """One batch tile of the 4-layer MLP.

    All matmuls hit the MXU in bf16 with f32 accumulation; bias-add / relu /
    tanh / action_lim scaling stay in f32 on the VPU/EUP.  The store is bf16.
    """
    lim = lim_ref[0, 0]                       # scalar from SMEM
    x = s_ref[...]                            # (tb, S)
    if x.dtype != jnp.bfloat16:               # accept bf16 state as-is
        x = x.astype(jnp.bfloat16)

    # fc1 + relu : (tb, S) @ (S, 256)
    h = jnp.dot(x, w1_ref[...], preferred_element_type=jnp.float32)
    h = jnp.maximum(h + b_ref[0:1, :], 0.0)                         # (tb, 256)

    # fc2 + relu : (tb, 256) @ (256, 128)   (packed rows 0:256)
    h = jnp.dot(h.astype(jnp.bfloat16), wpk_ref[0:HID1, :],
                preferred_element_type=jnp.float32)
    h = jnp.maximum(h + b_ref[1:2, 0:HID2], 0.0)                    # (tb, 128)

    # fc3 + relu : (tb, 128) @ (128, 128)   (packed rows 256:384, cols 64.. =0)
    h = jnp.dot(h.astype(jnp.bfloat16), wpk_ref[HID1:HID1 + HID3_PAD, :],
                preferred_element_type=jnp.float32)
    h = jnp.maximum(h + b_ref[2:3, 0:HID3_PAD], 0.0)                # (tb, 128)

    # fc4 + tanh * action_lim : (tb, 128) @ (128, 128)  (packed rows 384:512)
    a = jnp.dot(h.astype(jnp.bfloat16),
                wpk_ref[HID1 + HID3_PAD:HID1 + 2 * HID3_PAD, :],
                preferred_element_type=jnp.float32)
    a = jnp.tanh(a + b_ref[3:4, 0:OUT_PAD]) * lim                   # (tb, 128)

    out_ref[...] = a.astype(out_ref.dtype)                          # bf16 store


def init_actor_params(key, state_dim, action_dim):
    """f32 'master' parameters with the module's logical shapes.
    Weights stored transposed vs. torch, i.e. [in, out], biases as [1, out].
    fc1..fc3 weights ~ U(-1/sqrt(256), +1/sqrt(256)) (fanin_init), fc4 ~ U(-EPS, EPS)."""
    EPS = 0.003
    v = 1.0 / jnp.sqrt(256.0)
    ks = jax.random.split(key, 8)

    def u(k, shape, lim):
        return jax.random.uniform(k, shape, jnp.float32, -lim, lim)

    return {
        "w1": u(ks[0], (state_dim, 256), v),   "b1": u(ks[1], (1, 256), v),
        "w2": u(ks[2], (256, 128), v),         "b2": u(ks[3], (1, 128), v),
        "w3": u(ks[4], (128, 64), v),          "b3": u(ks[5], (1, 64), v),
        "w4": u(ks[6], (64, action_dim), EPS), "b4": u(ks[7], (1, action_dim), EPS),
    }


def pack_actor_params(params, action_dim):
    """Kernel-ready operands:
       * w1:    (state_dim, 256) bf16
       * wpack: (512, 128) bf16 -- fc2 rows 0:256, fc3 rows 256:384 (cols 0:64),
                fc4 rows 384:448 (cols 0:action_dim); everything else zero.
       * bias:  (8, 256) f32 -- one row per layer, zero-padded.
    """
    assert action_dim <= OUT_PAD, f"action_dim={action_dim} > {OUT_PAD} unsupported"
    assert params["w2"].shape == (HID1, HID2)
    assert params["w3"].shape == (HID2, 64)
    assert params["w4"].shape == (64, action_dim)

    w1 = params["w1"].astype(jnp.bfloat16)                        # (S, 256)

    wpack = jnp.zeros((WPACK_ROWS, OUT_PAD), jnp.float32)
    wpack = wpack.at[0:HID1, 0:HID2].set(params["w2"])
    wpack = wpack.at[HID1:HID1 + HID2, 0:64].set(params["w3"])
    wpack = wpack.at[HID1 + HID3_PAD:HID1 + HID3_PAD + 64, 0:action_dim].set(params["w4"])
    wpack = wpack.astype(jnp.bfloat16)                            # (512, 128)

    bias = jnp.zeros((8, 256), jnp.float32)
    bias = bias.at[0, :256].set(params["b1"].reshape(-1))
    bias = bias.at[1, :128].set(params["b2"].reshape(-1))
    bias = bias.at[2, :64].set(params["b3"].reshape(-1))
    bias = bias.at[3, :action_dim].set(params["b4"].reshape(-1))

    return {"w1": w1, "wpack": wpack, "bias": bias}


def actor_forward(state, packed, action_lim, action_dim, *, block_b=512):
    """state: [B, state_dim] f32 (bf16 also accepted). Returns [B, action_dim] f32."""
    assert block_b % 16 == 0, "block_b must be a multiple of 16 (bf16 sublane packing)"
    B, S = state.shape
    lim = jnp.asarray(action_lim, jnp.float32).reshape(1, 1)

    # --- tile selection -------------------------------------------------
    # v7x: split moderate batches into >=2 tiles so both TensorCores work.
    # v5e/v6e: single sequential TC -> use the biggest tile that fits block_b.
    ncores = _num_tensorcores()
    min_tiles = 2 if (ncores >= 2 and B >= 64) else 1
    num_tiles = max(min_tiles, pl.cdiv(B, block_b))
    if num_tiles == 1:
        tb = _round_up(max(B, 1), 8)            # gridless: full-array blocks
    else:
        tb = _round_up(pl.cdiv(B, num_tiles), 16)  # 16: bf16 output sublanes
    b_pad = _round_up(B, tb)
    num_tiles = b_pad // tb

    if b_pad != B:
        state = jnp.pad(state, ((0, b_pad - B), (0, 0)))

    operands = (lim, state, packed["w1"], packed["wpack"], packed["bias"])
    out_shape = jax.ShapeDtypeStruct((b_pad, OUT_PAD), jnp.bfloat16)

    if num_tiles == 1:
        # Single-shot: no grid -> no pipelining prologue / double-buffering.
        out = pl.pallas_call(
            _actor_kernel,
            out_shape=out_shape,
            in_specs=[pl.BlockSpec(memory_space=pltpu.MemorySpace.SMEM)]
            + [pl.BlockSpec(memory_space=pltpu.MemorySpace.VMEM)] * 4,
            out_specs=pl.BlockSpec(memory_space=pltpu.MemorySpace.VMEM),
        )(*operands)
    else:
        # Weights/bias: constant index maps -> VMEM-resident across the grid.
        # (Total footprint ~160 KB, so an extra pipeline buffer is irrelevant;
        #  pipeline_mode=Buffered(1) deliberately omitted for portability.)
        def resident(arr):
            return pl.BlockSpec(arr.shape, lambda i: (0,) * arr.ndim)

        out = pl.pallas_call(
            _actor_kernel,
            out_shape=out_shape,
            grid=(num_tiles,),
            in_specs=[
                pl.BlockSpec(memory_space=pltpu.MemorySpace.SMEM),   # action_lim
                pl.BlockSpec((tb, S), lambda i: (i, 0)),             # state tile
                resident(packed["w1"]),
                resident(packed["wpack"]),
                resident(packed["bias"]),
            ],
            out_specs=pl.BlockSpec((tb, OUT_PAD), lambda i: (i, 0)),
            compiler_params=pltpu.CompilerParams(
                dimension_semantics=("parallel",)),   # shards over 2 TCs on v7x
        )(*operands)

    # Raw kernel output rows [B:b_pad] / cols [action_dim:128] are padding junk.
    return out[:B, :action_dim].astype(jnp.float32)


def actor_reference(state, params, action_lim):
    """Pure-JAX f32 reference (matches the PyTorch module)."""
    h = jnp.maximum(state @ params["w1"] + params["b1"], 0.0)
    h = jnp.maximum(h @ params["w2"] + params["b2"], 0.0)
    h = jnp.maximum(h @ params["w3"] + params["b3"], 0.0)
    return jnp.tanh(h @ params["w4"] + params["b4"]) * action_lim


if __name__ == "__main__":
    state_dim = 32
    action_dim = 8
    action_lim = 2.0

    key = jax.random.PRNGKey(0)
    k_params, k_s1, k_s2, k_s3 = jax.random.split(key, 4)

    params = init_actor_params(k_params, state_dim, action_dim)
    packed = pack_actor_params(params, action_dim)

    # Tolerance is loose vs. the f32 reference because weights, inter-layer
    # activations and the stored output are bf16 (documented dtype choice).
    ATOL = RTOL = 1e-2

    # 1) Tiny batch -> gridless single-shot path.
    state_small = jax.random.normal(k_s1, (2, state_dim), jnp.float32)
    out_small = jax.block_until_ready(
        actor_forward(state_small, packed, action_lim, action_dim))
    ref_small = actor_reference(state_small, params, action_lim)
    assert out_small.shape == (2, action_dim), out_small.shape
    assert jnp.allclose(out_small, ref_small, atol=ATOL, rtol=RTOL)

    # 2) Moderate batch -> gridless on v5e/v6e, 2-tile parallel split on v7x.
    state_mid = jax.random.normal(k_s2, (100, state_dim), jnp.float32)
    out_mid = jax.block_until_ready(
        actor_forward(state_mid, packed, action_lim, action_dim))
    ref_mid = actor_reference(state_mid, params, action_lim)
    assert out_mid.shape == (100, action_dim), out_mid.shape
    assert jnp.allclose(out_mid, ref_mid, atol=ATOL, rtol=RTOL)

    # 3) Large batch -> batch-tiled "parallel" grid path (512-row blocks).
    state_big = jax.random.normal(k_s3, (1024, state_dim), jnp.float32)
    out_big = jax.block_until_ready(
        actor_forward(state_big, packed, action_lim, action_dim, block_b=512))
    ref_big = actor_reference(state_big, params, action_lim)
    assert out_big.shape == (1024, action_dim), out_big.shape
    assert jnp.allclose(out_big, ref_big, atol=ATOL, rtol=RTOL)

    print("KERNEL_OK")
</pallas_src>

<mosaic_0001>
module attributes {stable_mosaic.version = 11 : i64} {
  func.func @_actor_kernel(%arg0: memref<1x1xf32, #tpu.memory_space<smem>>, %arg1: memref<8x32xf32, #tpu.memory_space<vmem>>, %arg2: memref<32x256xbf16, #tpu.memory_space<vmem>>, %arg3: memref<512x128xbf16, #tpu.memory_space<vmem>>, %arg4: memref<8x256xf32, #tpu.memory_space<vmem>>, %arg5: memref<8x128xbf16, #tpu.memory_space<vmem>>) attributes {dimension_semantics = [], scalar_prefetch = 0 : i64, scratch_operands = 0 : i64, tpu.core_type = #tpu.core_type<tc>} {
    %c0 = arith.constant 0 : index
    %c0_0 = arith.constant 0 : index
    %0 = memref.load %arg0[%c0, %c0_0] : memref<1x1xf32, #tpu.memory_space<smem>>
    %c0_1 = arith.constant 0 : index
    %c0_2 = arith.constant 0 : index
    %1 = vector.load %arg1[%c0_1, %c0_2] : memref<8x32xf32, #tpu.memory_space<vmem>>, vector<8x32xf32>
    %2 = arith.truncf %1 : vector<8x32xf32> to vector<8x32xbf16>
    %c0_3 = arith.constant 0 : index
    %c0_4 = arith.constant 0 : index
    %3 = vector.load %arg2[%c0_3, %c0_4] : memref<32x256xbf16, #tpu.memory_space<vmem>>, vector<32x256xbf16>
    %cst = arith.constant dense<0.000000e+00> : vector<8x256xf32>
    %4 = tpu.matmul %2, %3, %cst {dimension_numbers = #tpu.dot_dimension_numbers<[1], [0], [0], [1], [0, 0, 1, 1], [], []>} : vector<8x32xbf16>, vector<32x256xbf16>, vector<8x256xf32> -> vector<8x256xf32>
    %c0_5 = arith.constant 0 : index
    %c0_6 = arith.constant 0 : index
    %5 = vector.load %arg4[%c0_5, %c0_6] : memref<8x256xf32, #tpu.memory_space<vmem>>, vector<1x256xf32>
    %6 = vector.broadcast %5 : vector<1x256xf32> to vector<8x256xf32>
    %7 = arith.addf %4, %6 : vector<8x256xf32>
    %cst_7 = arith.constant 0.000000e+00 : f32
    %8 = vector.broadcast %cst_7 : f32 to vector<8x256xf32>
    %9 = arith.maximumf %7, %8 : vector<8x256xf32>
    %10 = arith.truncf %9 : vector<8x256xf32> to vector<8x256xbf16>
    %c0_8 = arith.constant 0 : index
    %c0_9 = arith.constant 0 : index
    %11 = vector.load %arg3[%c0_8, %c0_9] : memref<512x128xbf16, #tpu.memory_space<vmem>>, vector<256x128xbf16>
    %cst_10 = arith.constant dense<0.000000e+00> : vector<8x128xf32>
    %12 = tpu.matmul %10, %11, %cst_10 {dimension_numbers = #tpu.dot_dimension_numbers<[1], [0], [0], [1], [0, 0, 1, 1], [], []>} : vector<8x256xbf16>, vector<256x128xbf16>, vector<8x128xf32> -> vector<8x128xf32>
    %c1 = arith.constant 1 : index
    %c0_11 = arith.constant 0 : index
    %13 = vector.load %arg4[%c1, %c0_11] : memref<8x256xf32, #tpu.memory_space<vmem>>, vector<1x128xf32>
    %14 = vector.broadcast %13 : vector<1x128xf32> to vector<8x128xf32>
    %15 = arith.addf %12, %14 : vector<8x128xf32>
    %cst_12 = arith.constant 0.000000e+00 : f32
    %16 = vector.broadcast %cst_12 : f32 to vector<8x128xf32>
    %17 = arith.maximumf %15, %16 : vector<8x128xf32>
    %18 = arith.truncf %17 : vector<8x128xf32> to vector<8x128xbf16>
    %c256 = arith.constant 256 : index
    %c0_13 = arith.constant 0 : index
    %19 = vector.load %arg3[%c256, %c0_13] : memref<512x128xbf16, #tpu.memory_space<vmem>>, vector<128x128xbf16>
    %cst_14 = arith.constant dense<0.000000e+00> : vector<8x128xf32>
    %20 = tpu.matmul %18, %19, %cst_14 {dimension_numbers = #tpu.dot_dimension_numbers<[1], [0], [0], [1], [0, 0, 1, 1], [], []>} : vector<8x128xbf16>, vector<128x128xbf16>, vector<8x128xf32> -> vector<8x128xf32>
    %c2 = arith.constant 2 : index
    %c0_15 = arith.constant 0 : index
    %21 = vector.load %arg4[%c2, %c0_15] : memref<8x256xf32, #tpu.memory_space<vmem>>, vector<1x128xf32>
    %22 = vector.broadcast %21 : vector<1x128xf32> to vector<8x128xf32>
    %23 = arith.addf %20, %22 : vector<8x128xf32>
    %cst_16 = arith.constant 0.000000e+00 : f32
    %24 = vector.broadcast %cst_16 : f32 to vector<8x128xf32>
    %25 = arith.maximumf %23, %24 : vector<8x128xf32>
    %26 = arith.truncf %25 : vector<8x128xf32> to vector<8x128xbf16>
    %c384 = arith.constant 384 : index
    %c0_17 = arith.constant 0 : index
    %27 = vector.load %arg3[%c384, %c0_17] : memref<512x128xbf16, #tpu.memory_space<vmem>>, vector<128x128xbf16>
    %cst_18 = arith.constant dense<0.000000e+00> : vector<8x128xf32>
    %28 = tpu.matmul %26, %27, %cst_18 {dimension_numbers = #tpu.dot_dimension_numbers<[1], [0], [0], [1], [0, 0, 1, 1], [], []>} : vector<8x128xbf16>, vector<128x128xbf16>, vector<8x128xf32> -> vector<8x128xf32>
    %c3 = arith.constant 3 : index
    %c0_19 = arith.constant 0 : index
    %29 = vector.load %arg4[%c3, %c0_19] : memref<8x256xf32, #tpu.memory_space<vmem>>, vector<1x128xf32>
    %30 = vector.broadcast %29 : vector<1x128xf32> to vector<8x128xf32>
    %31 = arith.addf %28, %30 : vector<8x128xf32>
    %32 = math.tanh %31 : vector<8x128xf32>
    %33 = vector.broadcast %0 : f32 to vector<8x128xf32>
    %34 = arith.mulf %32, %33 : vector<8x128xf32>
    %35 = arith.truncf %34 : vector<8x128xf32> to vector<8x128xbf16>
    %c0_20 = arith.constant 0 : index
    %c0_21 = arith.constant 0 : index
    %36 = vector.load %arg5[%c0_20, %c0_21] : memref<8x128xbf16, #tpu.memory_space<vmem>>, vector<8x128xbf16>
    tpu.vector_store %arg5[%c0_20, %c0_21], %35 {strides = array<i32>} : memref<8x128xbf16, #tpu.memory_space<vmem>>, vector<8x128xbf16>,
    return
  }
}

</mosaic_0001>

<llo_original>
// kernel: tpu_custom_call.1
$region0: #{tpu_custom_call.1}
  #allocation0 [shape = 'u32[]', space=smem, size = 0x4, offset = 0x4, fixed_abs, tag = 'smem constant byte address 0x4 - core index']
  #allocation1 [shape = 'u32[72,128]{1,0:T(1,128)}', space=vmem, size = 0x9000, scoped, tag = 'internal scratch']
  #allocation2 [shape = 'f32[1,1]{1,0:T(1,128)S(6)}', space=smem, size = 0x200, scoped, tag = 'scoped memory for tpu_custom_call.1']
  %s0 = inlined_call_operand.<no memory space> [shape: f32[1,1], index: 0, kind: input, shape index: {}]
  %s1 = inlined_call_operand.hbm [shape: f32[8,32], index: 1, kind: input, shape index: {}]
  %s2 = inlined_call_operand.hbm [shape: bf16[32,256], index: 2, kind: input, shape index: {}]
  %s3 = inlined_call_operand.hbm [shape: bf16[512,128], index: 3, kind: input, shape index: {}]
  %s4 = inlined_call_operand.hbm [shape: f32[8,256], index: 4, kind: input, shape index: {}]
  %s5 = inlined_call_operand.hbm [shape: bf16[8,128], index: 5, kind: output, shape index: {}]
  %s6 = sld [smem:[#allocation0]]
  $region46: #{tpu_custom_call.1} parent=0
    _
  %s8 = ssub.s32 1, %s6
  %s9 = scalar_select 0, %s8, %s6
  %10 = sst [smem:[#allocation2]] %s0
  $region1: #{tpu_custom_call.1} parent=0
    #allocation3 [shape = 'u8[4096]{0}', space=vmem, size = 0x1000, scoped, tag = 'input window, operand 1, single buffered']
    #allocation4 [shape = 's32[1]{0}', space=sflag, size = 0x4, scoped, tag = 'scoped memory for tpu_custom_call.1']
    #allocation5 [shape = 's32[1]{0}', space=sflag, size = 0x4, scoped, tag = 'scoped memory for tpu_custom_call.1']
    #allocation6 [shape = 'u8[16384]{0}', space=vmem, size = 0x4000, scoped, tag = 'input window, operand 2, single buffered']
    #allocation7 [shape = 's32[1]{0}', space=sflag, size = 0x4, scoped, tag = 'scoped memory for tpu_custom_call.1']
    #allocation8 [shape = 'u8[131072]{0}', space=vmem, size = 0x20000, scoped, tag = 'input window, operand 3, single buffered']
    #allocation9 [shape = 'u8[8192]{0}', space=vmem, size = 0x2000, scoped, tag = 'input window, operand 4, single buffered']
    #allocation10 [shape = 's32[1]{0}', space=sflag, size = 0x4, scoped, tag = 'scoped memory for tpu_custom_call.1']
    #allocation11 [shape = 'u8[2048]{0}', space=vmem, size = 0x800, scoped, tag = 'output window, operand 0, single buffered']
    %11 = vsyncpa [#allocation4], 0
    %12 = vsyncpa [#allocation7], 0
    %13 = vsyncpa [#allocation10], 0
    %14 = vsyncpa [#allocation5], 0
    // Predicated region
    $region2: #{tpu_custom_call.1} parent=1 // pred_check
      _
    $region3: #{tpu_custom_call.1} parent=1 // pred_check_branch
      %16 = sbr.rel (0) target = $region5
    $region4: #{tpu_custom_call.1} parent=1 // pred_region
      _
    $region5: #{tpu_custom_call.1} parent=1 // pred_fallthru
      _
    // Predicated region
    $region6: #{tpu_custom_call.1} parent=1 // pred_check
      _
    $region7: #{tpu_custom_call.1} parent=1 // pred_check_branch
      %18 = sbr.rel (0) target = $region9
    $region8: #{tpu_custom_call.1} parent=1 // pred_region
      %20 = vsyncadd [#allocation4], 0
      %s22 = sshll.u32 %s1, 4
      %s23 = int_to_ptr.hbm [resolvable:$true] %s22
      %s24 = sshll.u32 [#allocation3], 4
      %s25 = int_to_ptr.vmem [resolvable:$true] %s24
      %27 = dma.hbm_to_vmem [thread:$0]  %s23, 128, %s25, [#allocation4]
    $region9: #{tpu_custom_call.1} parent=1 // pred_fallthru
      _
    // Predicated region
    $region10: #{tpu_custom_call.1} parent=1 // pred_check
      _
    $region11: #{tpu_custom_call.1} parent=1 // pred_check_branch
      %29 = sbr.rel (0) target = $region13
    $region12: #{tpu_custom_call.1} parent=1 // pred_region
      %31 = vsyncadd [#allocation7], 0
      %s32 = sshll.u32 %s2, 4
      %s33 = int_to_ptr.hbm [resolvable:$true] %s32
      %s34 = sshll.u32 [#allocation6], 4
      %s35 = int_to_ptr.vmem [resolvable:$true] %s34
      %40 = dma.hbm_to_vmem [thread:$0]  %s33, 512, %s35, [#allocation7], 128, 128, 8
    $region13: #{tpu_custom_call.1} parent=1 // pred_fallthru
      _
    // Predicated region
    $region14: #{tpu_custom_call.1} parent=1 // pred_check
      _
    $region15: #{tpu_custom_call.1} parent=1 // pred_check_branch
      %42 = sbr.rel (0) target = $region17
    $region16: #{tpu_custom_call.1} parent=1 // pred_region
      %44 = vsyncadd [#allocation7], 0
      %s45 = sshll.u32 %s3, 4
      %s46 = int_to_ptr.hbm [resolvable:$true] %s45
      %s47 = sshll.u32 [#allocation8], 4
      %s48 = int_to_ptr.vmem [resolvable:$true] %s47
      %53 = dma.hbm_to_vmem [thread:$0]  %s46, 4096, %s48, [#allocation7], 64, 64, 4
    $region17: #{tpu_custom_call.1} parent=1 // pred_fallthru
      _
    // Predicated region
    $region18: #{tpu_custom_call.1} parent=1 // pred_check
      _
    $region19: #{tpu_custom_call.1} parent=1 // pred_check_branch
      %55 = sbr.rel (0) target = $region21
    $region20: #{tpu_custom_call.1} parent=1 // pred_region
      %57 = vsyncadd [#allocation10], 0
      %s59 = sshll.u32 %s4, 4
      %s60 = int_to_ptr.hbm [resolvable:$true] %s59
      %s61 = sshll.u32 [#allocation9], 4
      %s62 = int_to_ptr.vmem [resolvable:$true] %s61
      %64 = dma.hbm_to_vmem [thread:$0]  %s60, 256, %s62, [#allocation10]
    $region21: #{tpu_custom_call.1} parent=1 // pred_fallthru
      _
    // Predicated region
    $region22: #{tpu_custom_call.1} parent=1 // pred_check
      _
    $region23: #{tpu_custom_call.1} parent=1 // pred_check_branch
      %66 = sbr.rel (0) target = $region25
    $region24: #{tpu_custom_call.1} parent=1 // pred_region
      %68 = dma.done [#allocation4], 128
    $region25: #{tpu_custom_call.1} parent=1 // pred_fallthru
      _
    // Predicated region
    $region26: #{tpu_custom_call.1} parent=1 // pred_check
      _
    $region27: #{tpu_custom_call.1} parent=1 // pred_check_branch
      %70 = sbr.rel (0) target = $region29
    $region28: #{tpu_custom_call.1} parent=1 // pred_region
      %72 = dma.done [#allocation7], 512
    $region29: #{tpu_custom_call.1} parent=1 // pred_fallthru
      _
    // Predicated region
    $region30: #{tpu_custom_call.1} parent=1 // pred_check
      _
    $region31: #{tpu_custom_call.1} parent=1 // pred_check_branch
      %74 = sbr.rel (0) target = $region33
    $region32: #{tpu_custom_call.1} parent=1 // pred_region
      %76 = dma.done [#allocation7], 4096
    $region33: #{tpu_custom_call.1} parent=1 // pred_fallthru
      _
    // Predicated region
    $region34: #{tpu_custom_call.1} parent=1 // pred_check
      _
    $region35: #{tpu_custom_call.1} parent=1 // pred_check_branch
      %78 = sbr.rel (0) target = $region37
    $region36: #{tpu_custom_call.1} parent=1 // pred_region
      %80 = dma.done [#allocation10], 256
    $region37: #{tpu_custom_call.1} parent=1 // pred_fallthru
      _
    %s82 = sld [smem:[#allocation2]]
    %v83 = vld [vmem:[#allocation3] sm:$0xff]
    %v84 = vpack.c.bf16 %v83, %v83
    %v85 = vld [vmem:[#allocation6] sm:$0xff]
    %v86 = vld [vmem:[#allocation6 + $0x8] sm:$0xff]
    %v87 = vld [vmem:[#allocation6 + $0x10] sm:$0xff]
    %v88 = vld [vmem:[#allocation6 + $0x18] sm:$0xff]
    %v89 = vld [vmem:[#allocation9] ss:$8 sm:$0x3]
    %v91 = vperm.slane %v89, 0
    %v92 = vperm.slane %v89, 1
    %v99 = vunpack.c.l.b16 %v85
    %v100 = vunpack.c.h.b16 %v85
    %v101 = vunpack.c.l.b16 %v86
    %v102 = vunpack.c.h.b16 %v86
    %v103 = vunpack.c.l.b16 %v87
    %v104 = vunpack.c.h.b16 %v87
    %v105 = vunpack.c.l.b16 %v88
    %v106 = vunpack.c.h.b16 %v88
    %v107 = vpack.c.b16 %v101, %v99
    %v108 = vpack.c.b16 %v102, %v100
    %v109 = vpack.c.b16 %v105, %v103
    %v110 = vpack.c.b16 %v106, %v104
    %vm115 = vcmask 261120
    %v117 = vsel %vm115, %v84, 0
    %119 = vmatpush.bf16.msra.mxu0 0
    %120 = vmatpush.bf16.msra.mxu0 0
    %121 = vmatpush.bf16.msra.mxu0 0
    %122 = vmatpush.bf16.msra.mxu0 0
    %123 = vmatpush.bf16.msra.mxu0 0
    %124 = vmatpush.bf16.msra.mxu0 0
    %125 = vmatpush.bf16.msra.mxu0 %v109
    %126 = vmatpush.bf16.msra.mxu0 %v107
    %127 = vmatmul.bf16.gmra.mxu0 %v117
    %v128 = vpop.f32.mrf.mxu0
    %v129 = vadd.f32 %v91, %v128
    %v130 = vpop.f32.mrf.mxu0
    %131 = vdwg.mxu0
    %132 = vmatpush.bf16.msra.mxu0 0
    %133 = vmatpush.bf16.msra.mxu0 0
    %134 = vmatpush.bf16.msra.mxu0 0
    %135 = vmatpush.bf16.msra.mxu0 0
    %136 = vmatpush.bf16.msra.mxu0 0
    %137 = vmatpush.bf16.msra.mxu0 0
    %138 = vmatpush.bf16.msra.mxu0 %v110
    %139 = vmatpush.bf16.msra.mxu0 %v108
    %140 = vmatmul.bf16.gmra.mxu0 %v117
    %v141 = vpop.f32.mrf.mxu0
    %v142 = vadd.f32 %v92, %v141
    %v143 = vpop.f32.mrf.mxu0
    %144 = vdwg.mxu0
    %v145 = vmax.f32 %v129, 0.0
    %v146 = vmax.f32 %v142, 0.0
    %v147 = vpack.c.bf16 %v145, %v145
    %v148 = vpack.c.bf16 %v146, %v146
    %v149 = vld [vmem:[#allocation8] sm:$0xf]
    %v150 = vld [vmem:[#allocation8 + $0x4] sm:$0xf]
    %v151 = vld [vmem:[#allocation8 + $0x8] sm:$0xf]
    %v152 = vld [vmem:[#allocation8 + $0xc] sm:$0xf]
    %v153 = vld [vmem:[#allocation8 + $0x10] sm:$0xf]
    %v154 = vld [vmem:[#allocation8 + $0x14] sm:$0xf]
    %v155 = vld [vmem:[#allocation8 + $0x18] sm:$0xf]
    %v156 = vld [vmem:[#allocation8 + $0x1c] sm:$0xf]
    %v157 = vld [vmem:[#allocation8 + $0x20] sm:$0xf]
    %v158 = vld [vmem:[#allocation8 + $0x24] sm:$0xf]
    %v159 = vld [vmem:[#allocation8 + $0x28] sm:$0xf]
    %v160 = vld [vmem:[#allocation8 + $0x2c] sm:$0xf]
    %v161 = vld [vmem:[#allocation8 + $0x30] sm:$0xf]
    %v162 = vld [vmem:[#allocation8 + $0x34] sm:$0xf]
    %v163 = vld [vmem:[#allocation8 + $0x38] sm:$0xf]
    %v164 = vld [vmem:[#allocation8 + $0x3c] sm:$0xf]
    %v165 = vld [vmem:[#allocation8 + $0x40] sm:$0xf]
    %v166 = vld [vmem:[#allocation8 + $0x44] sm:$0xf]
    %v167 = vld [vmem:[#allocation8 + $0x48] sm:$0xf]
    %v168 = vld [vmem:[#allocation8 + $0x4c] sm:$0xf]
    %v169 = vld [vmem:[#allocation8 + $0x50] sm:$0xf]
    %v170 = vld [vmem:[#allocation8 + $0x54] sm:$0xf]
    %v171 = vld [vmem:[#allocation8 + $0x58] sm:$0xf]
    %v172 = vld [vmem:[#allocation8 + $0x5c] sm:$0xf]
    %v173 = vld [vmem:[#allocation8 + $0x60] sm:$0xf]
    %v174 = vld [vmem:[#allocation8 + $0x64] sm:$0xf]
    %v175 = vld [vmem:[#allocation8 + $0x68] sm:$0xf]
    %v176 = vld [vmem:[#allocation8 + $0x6c] sm:$0xf]
    %v177 = vld [vmem:[#allocation8 + $0x70] sm:$0xf]
    %v178 = vld [vmem:[#allocation8 + $0x74] sm:$0xf]
    %v179 = vld [vmem:[#allocation8 + $0x78] sm:$0xf]
    %v180 = vld [vmem:[#allocation8 + $0x7c] sm:$0xf]
    %v181 = vld [vmem:[#allocation9 + $0x1] ss:$0 sm:$0xff]
    %v214 = vunpack.c.l.b16 %v149
    %v215 = vunpack.c.l.b16 %v150
    %v216 = vunpack.c.l.b16 %v151
    %v217 = vunpack.c.l.b16 %v152
    %v218 = vunpack.c.l.b16 %v153
    %v219 = vunpack.c.l.b16 %v154
    %v220 = vunpack.c.l.b16 %v155
    %v221 = vunpack.c.l.b16 %v156
    %v222 = vunpack.c.l.b16 %v157
    %v223 = vunpack.c.l.b16 %v158
    %v224 = vunpack.c.l.b16 %v159
    %v225 = vunpack.c.l.b16 %v160
    %v226 = vunpack.c.l.b16 %v161
    %v227 = vunpack.c.l.b16 %v162
    %v228 = vunpack.c.l.b16 %v163
    %v229 = vunpack.c.l.b16 %v164
    %v230 = vunpack.c.l.b16 %v165
    %v231 = vunpack.c.l.b16 %v166
    %v232 = vunpack.c.l.b16 %v167
    %v233 = vunpack.c.l.b16 %v168
    %v234 = vunpack.c.l.b16 %v169
    %v235 = vunpack.c.l.b16 %v170
    %v236 = vunpack.c.l.b16 %v171
    %v237 = vunpack.c.l.b16 %v172
    %v238 = vunpack.c.l.b16 %v173
    %v239 = vunpack.c.l.b16 %v174
    %v240 = vunpack.c.l.b16 %v175
    %v241 = vunpack.c.l.b16 %v176
    %v242 = vunpack.c.l.b16 %v177
    %v243 = vunpack.c.l.b16 %v178
    %v244 = vunpack.c.l.b16 %v179
    %v245 = vunpack.c.l.b16 %v180
    %v246 = vpack.c.b16 %v215, %v214
    %v247 = vpack.c.b16 %v217, %v216
    %v248 = vpack.c.b16 %v219, %v218
    %v249 = vpack.c.b16 %v221, %v220
    %v250 = vpack.c.b16 %v223, %v222
    %v251 = vpack.c.b16 %v225, %v224
    %v252 = vpack.c.b16 %v227, %v226
    %v253 = vpack.c.b16 %v229, %v228
    %v254 = vpack.c.b16 %v231, %v230
    %v255 = vpack.c.b16 %v233, %v232
    %v256 = vpack.c.b16 %v235, %v234
    %v257 = vpack.c.b16 %v237, %v236
    %v258 = vpack.c.b16 %v239, %v238
    %v259 = vpack.c.b16 %v241, %v240
    %v260 = vpack.c.b16 %v243, %v242
    %v261 = vpack.c.b16 %v245, %v244
    %278 = vmatpush.bf16.msra.mxu0 %v253
    %279 = vmatpush.bf16.msra.mxu0 %v252
    %280 = vmatpush.bf16.msra.mxu0 %v251
    %281 = vmatpush.bf16.msra.mxu0 %v250
    %282 = vmatpush.bf16.msra.mxu0 %v249
    %283 = vmatpush.bf16.msra.mxu0 %v248
    %284 = vmatpush.bf16.msra.mxu0 %v247
    %285 = vmatpush.bf16.msra.mxu0 %v246
    %286 = vmatmul.bf16.gmra.mxu0 %v147
    %v287 = vpop.f32.mrf.mxu0
    %v288 = vadd.f32 %v181, %v287
    %v289 = vpop.f32.mrf.mxu0
    %290 = vdwg.mxu0
    %291 = vmatpush.bf16.msra.mxu0 %v261
    %292 = vmatpush.bf16.msra.mxu0 %v260
    %293 = vmatpush.bf16.msra.mxu0 %v259
    %294 = vmatpush.bf16.msra.mxu0 %v258
    %295 = vmatpush.bf16.msra.mxu0 %v257
    %296 = vmatpush.bf16.msra.mxu0 %v256
    %297 = vmatpush.bf16.msra.mxu0 %v255
    %298 = vmatpush.bf16.msra.mxu0 %v254
    %299 = vmatmul.bf16.gmra.mxu0 %v148
    %v300 = vpop.f32.mrf.mxu0
    %v301 = vadd.f32 %v288, %v300
    %v302 = vpop.f32.mrf.mxu0
    %303 = vdwg.mxu0
    %v304 = vmax.f32 %v301, 0.0
    %v305 = vpack.c.bf16 %v304, %v304
    %v306 = vld [vmem:[#allocation8 + $0x80] sm:$0xf]
    %v307 = vld [vmem:[#allocation8 + $0x84] sm:$0xf]
    %v308 = vld [vmem:[#allocation8 + $0x88] sm:$0xf]
    %v309 = vld [vmem:[#allocation8 + $0x8c] sm:$0xf]
    %v310 = vld [vmem:[#allocation8 + $0x90] sm:$0xf]
    %v311 = vld [vmem:[#allocation8 + $0x94] sm:$0xf]
    %v312 = vld [vmem:[#allocation8 + $0x98] sm:$0xf]
    %v313 = vld [vmem:[#allocation8 + $0x9c] sm:$0xf]
    %v314 = vld [vmem:[#allocation8 + $0xa0] sm:$0xf]
    %v315 = vld [vmem:[#allocation8 + $0xa4] sm:$0xf]
    %v316 = vld [vmem:[#allocation8 + $0xa8] sm:$0xf]
    %v317 = vld [vmem:[#allocation8 + $0xac] sm:$0xf]
    %v318 = vld [vmem:[#allocation8 + $0xb0] sm:$0xf]
    %v319 = vld [vmem:[#allocation8 + $0xb4] sm:$0xf]
    %v320 = vld [vmem:[#allocation8 + $0xb8] sm:$0xf]
    %v321 = vld [vmem:[#allocation8 + $0xbc] sm:$0xf]
    %v322 = vld [vmem:[#allocation9 + $0x2] ss:$0 sm:$0xff]
    %v339 = vunpack.c.l.b16 %v306
    %v340 = vunpack.c.l.b16 %v307
    %v341 = vunpack.c.l.b16 %v308
    %v342 = vunpack.c.l.b16 %v309
    %v343 = vunpack.c.l.b16 %v310
    %v344 = vunpack.c.l.b16 %v311
    %v345 = vunpack.c.l.b16 %v312
    %v346 = vunpack.c.l.b16 %v313
    %v347 = vunpack.c.l.b16 %v314
    %v348 = vunpack.c.l.b16 %v315
    %v349 = vunpack.c.l.b16 %v316
    %v350 = vunpack.c.l.b16 %v317
    %v351 = vunpack.c.l.b16 %v318
    %v352 = vunpack.c.l.b16 %v319
    %v353 = vunpack.c.l.b16 %v320
    %v354 = vunpack.c.l.b16 %v321
    %v355 = vpack.c.b16 %v340, %v339
    %v356 = vpack.c.b16 %v342, %v341
    %v357 = vpack.c.b16 %v344, %v343
    %v358 = vpack.c.b16 %v346, %v345
    %v359 = vpack.c.b16 %v348, %v347
    %v360 = vpack.c.b16 %v350, %v349
    %v361 = vpack.c.b16 %v352, %v351
    %v362 = vpack.c.b16 %v354, %v353
    %371 = vmatpush.bf16.msra.mxu0 %v362
    %372 = vmatpush.bf16.msra.mxu0 %v361
    %373 = vmatpush.bf16.msra.mxu0 %v360
    %374 = vmatpush.bf16.msra.mxu0 %v359
    %375 = vmatpush.bf16.msra.mxu0 %v358
    %376 = vmatpush.bf16.msra.mxu0 %v357
    %377 = vmatpush.bf16.msra.mxu0 %v356
    %378 = vmatpush.bf16.msra.mxu0 %v355
    %379 = vmatmul.bf16.gmra.mxu0 %v305
    %v380 = vpop.f32.mrf.mxu0
    %v381 = vadd.f32 %v322, %v380
    %v382 = vpop.f32.mrf.mxu0
    %383 = vdwg.mxu0
    %v384 = vmax.f32 %v381, 0.0
    %v385 = vpack.c.bf16 %v384, %v384
    %v386 = vld [vmem:[#allocation8 + $0xc0] sm:$0xf]
    %v387 = vld [vmem:[#allocation8 + $0xc4] sm:$0xf]
    %v388 = vld [vmem:[#allocation8 + $0xc8] sm:$0xf]
    %v389 = vld [vmem:[#allocation8 + $0xcc] sm:$0xf]
    %v390 = vld [vmem:[#allocation8 + $0xd0] sm:$0xf]
    %v391 = vld [vmem:[#allocation8 + $0xd4] sm:$0xf]
    %v392 = vld [vmem:[#allocation8 + $0xd8] sm:$0xf]
    %v393 = vld [vmem:[#allocation8 + $0xdc] sm:$0xf]
    %v394 = vld [vmem:[#allocation8 + $0xe0] sm:$0xf]
    %v395 = vld [vmem:[#allocation8 + $0xe4] sm:$0xf]
    %v396 = vld [vmem:[#allocation8 + $0xe8] sm:$0xf]
    %v397 = vld [vmem:[#allocation8 + $0xec] sm:$0xf]
    %v398 = vld [vmem:[#allocation8 + $0xf0] sm:$0xf]
    %v399 = vld [vmem:[#allocation8 + $0xf4] sm:$0xf]
    %v400 = vld [vmem:[#allocation8 + $0xf8] sm:$0xf]
    %v401 = vld [vmem:[#allocation8 + $0xfc] sm:$0xf]
    %v402 = vld [vmem:[#allocation9 + $0x3] ss:$0 sm:$0xff]
    %v419 = vunpack.c.l.b16 %v386
    %v420 = vunpack.c.l.b16 %v387
    %v421 = vunpack.c.l.b16 %v388
    %v422 = vunpack.c.l.b16 %v389
    %v423 = vunpack.c.l.b16 %v390
    %v424 = vunpack.c.l.b16 %v391
    %v425 = vunpack.c.l.b16 %v392
    %v426 = vunpack.c.l.b16 %v393
    %v427 = vunpack.c.l.b16 %v394
    %v428 = vunpack.c.l.b16 %v395
    %v429 = vunpack.c.l.b16 %v396
    %v430 = vunpack.c.l.b16 %v397
    %v431 = vunpack.c.l.b16 %v398
    %v432 = vunpack.c.l.b16 %v399
    %v433 = vunpack.c.l.b16 %v400
    %v434 = vunpack.c.l.b16 %v401
    %v435 = vpack.c.b16 %v420, %v419
    %v436 = vpack.c.b16 %v422, %v421
    %v437 = vpack.c.b16 %v424, %v423
    %v438 = vpack.c.b16 %v426, %v425
    %v439 = vpack.c.b16 %v428, %v427
    %v440 = vpack.c.b16 %v430, %v429
    %v441 = vpack.c.b16 %v432, %v431
    %v442 = vpack.c.b16 %v434, %v433
    %451 = vmatpush.bf16.msra.mxu0 %v442
    %452 = vmatpush.bf16.msra.mxu0 %v441
    %453 = vmatpush.bf16.msra.mxu0 %v440
    %454 = vmatpush.bf16.msra.mxu0 %v439
    %455 = vmatpush.bf16.msra.mxu0 %v438
    %456 = vmatpush.bf16.msra.mxu0 %v437
    %457 = vmatpush.bf16.msra.mxu0 %v436
    %458 = vmatpush.bf16.msra.mxu0 %v435
    %459 = vmatmul.bf16.gmra.mxu0 %v385
    %v460 = vpop.f32.mrf.mxu0
    %v461 = vadd.f32 %v402, %v460
    %v462 = vpop.f32.mrf.mxu0
    %463 = vdwg.mxu0
    %v464 = vtanh.pop %v461
    %v465 = vstv %s82
    %v466 = vmul.f32 %v464, %v465
    %v467 = vpack.c.bf16 %v466, %v466
    %468 = vst [vmem:[#allocation11] sm:$0xf] %v467
    // Predicated region
    $region38: #{tpu_custom_call.1} parent=1 // pred_check
      _
    $region39: #{tpu_custom_call.1} parent=1 // pred_check_branch
      %470 = sbr.rel (0) target = $region41
    $region40: #{tpu_custom_call.1} parent=1 // pred_region
      %472 = vsyncadd [#allocation5], 0
      %s474 = sshll.u32 [#allocation11], 4
      %s475 = int_to_ptr.vmem [resolvable:$true] %s474
      %s476 = sshll.u32 %s5, 4
      %s477 = int_to_ptr.hbm [resolvable:$true] %s476
      %479 = dma.vmem_to_hbm [thread:$0]  %s475, 64, %s477, [#allocation5]
    $region41: #{tpu_custom_call.1} parent=1 // pred_fallthru
      _
    // Predicated region
    $region42: #{tpu_custom_call.1} parent=1 // pred_check
      _
    $region43: #{tpu_custom_call.1} parent=1 // pred_check_branch
      %481 = sbr.rel (0) target = $region45
    $region44: #{tpu_custom_call.1} parent=1 // pred_region
      %483 = dma.done [#allocation5], 64
    $region45: #{tpu_custom_call.1} parent=1 // pred_fallthru
      _
    %484 = vsyncpa [#allocation4], 1
    %485 = vsyncpa [#allocation7], 1
    %486 = vsyncpa [#allocation10], 1
    %487 = vsyncpa [#allocation5], 1

</llo_original>
